<compile_context>
chip_gen: v7x
topology: tpu7x:2x2x1
jax: 0.10.0
libtpu: 0.0.40
codegen_flags: <defaults>
</compile_context>

<pallas_src>
import functools

import jax
import jax.numpy as jnp
from jax.experimental import pallas as pl
from jax.experimental.pallas import tpu as pltpu


def _lstm_chunk_kernel(gx_ref, whh_ref, out_ref, h_scr, c_scr, *,
                       chunk, seq, hidden, unroll, mask_time):
    """One time-chunk of the LSTM recurrence.

    gx_ref  : (chunk, Bp, 4H)  precomputed x @ W_ih^T + (b_ih + b_hh), this chunk
    whh_ref : (H, 4H)          W_hh^T (same block every grid step)
    out_ref : (Bp, H)          final hidden state h_T (written on last chunk)
    h_scr   : (Bp, H) f32      hidden state carried across chunks
    c_scr   : (Bp, H) f32      cell state carried across chunks
    """
    ci = pl.program_id(0)
    H = hidden

    @pl.when(ci == 0)
    def _():
        h_scr[...] = jnp.zeros_like(h_scr)
        c_scr[...] = jnp.zeros_like(c_scr)

    # Hoisted once per grid step; reused by every unrolled iteration below.
    whh = whh_ref[...]

    def step(t, carry):
        h_prev, c_prev = carry
        # Only the recurrent projection is on the serial critical path:
        # one (Bp, H) x (H, 4H) MXU push per time step.
        gates = gx_ref[t] + jnp.dot(h_prev, whh,
                                    preferred_element_type=jnp.float32)
        # Lane-dense nonlinearities over the full (Bp, 4H) tile, slice after.
        sig = jax.nn.sigmoid(gates)
        tng = jnp.tanh(gates)
        i_g = sig[:, 0 * H:1 * H]
        f_g = sig[:, 1 * H:2 * H]
        g_g = tng[:, 2 * H:3 * H]
        o_g = sig[:, 3 * H:4 * H]

        c_new = f_g * c_prev + i_g * g_g
        h_new = o_g * jnp.tanh(c_new)

        if mask_time:
            # Trailing padded time steps (seq not a multiple of chunk) must
            # not advance the state.  Cheap scalar-cond select.
            valid = (ci * chunk + t) < seq
            h_new = jnp.where(valid, h_new, h_prev)
            c_new = jnp.where(valid, c_new, c_prev)
        return h_new, c_new

    h_f, c_f = jax.lax.fori_loop(0, chunk, step, (h_scr[...], c_scr[...]),
                                 unroll=unroll)
    h_scr[...] = h_f
    c_scr[...] = c_f

    @pl.when(ci == pl.num_programs(0) - 1)
    def _():
        out_ref[...] = h_f.astype(out_ref.dtype)


@functools.partial(jax.jit, static_argnames=("hidden_size",))
def lstm_forward(x, w_ih, w_hh, b_ih, b_hh, *, hidden_size):
    """Mirrors LSTMImplementation.forward.

    x    : (batch, N_cols, seq)
    w_ih : (4H, N_cols), w_hh : (4H, H), b_ih/b_hh : (4H,)
    returns (batch, 1, hidden_size)
    """
    batch, n_cols, seq = x.shape
    H = hidden_size
    f32 = jnp.float32

    # --- pick padded batch, time-chunk size, padded seq (all static) --------
    b_pad = max(8, ((batch + 7) // 8) * 8)          # full sublanes
    bytes_per_step = b_pad * 4 * H * 4              # one (Bp, 4H) f32 slice
    chunk = max(1, min(seq, (4 * 1024 * 1024) // bytes_per_step))  # ~4MiB/buf
    n_chunks = (seq + chunk - 1) // chunk
    seq_pad = n_chunks * chunk
    unroll = chunk if chunk <= 8 else 8

    # --- pad the *small* x tensor, then hoisted input projection ------------
    # gates_x[s, b, :] = x[b, :, s] @ W_ih^T + (b_ih + b_hh)
    # (fuses the permute((2, 0, 1)); padded layout emitted directly).
    x_p = x.astype(f32)
    if b_pad != batch or seq_pad != seq:
        x_p = jnp.pad(x_p, ((0, b_pad - batch), (0, 0), (0, seq_pad - seq)))
    gates_x = jnp.einsum("bns,nf->sbf", x_p,
                         jnp.transpose(w_ih).astype(f32)) \
        + (b_ih + b_hh).astype(f32)                 # (seq_pad, b_pad, 4H)

    whh_T = jnp.transpose(w_hh).astype(f32)         # (H, 4H)

    # --- VMEM budget from actual footprint -----------------------------------
    footprint = (2 * chunk * b_pad * 4 * H * 4      # gates chunk, double-buffered
                 + 2 * H * 4 * H * 4                # whh (double-buffered)
                 + b_pad * H * 4                    # output
                 + 2 * b_pad * H * 4)               # h/c scratch
    vmem_limit = int(min(64 * 2**20, max(16 * 2**20, 2 * footprint)))

    kernel = functools.partial(
        _lstm_chunk_kernel,
        chunk=chunk, seq=seq, hidden=H, unroll=unroll,
        mask_time=(seq_pad != seq),
    )

    h_last = pl.pallas_call(
        kernel,
        out_shape=jax.ShapeDtypeStruct((b_pad, H), f32),
        grid_spec=pltpu.PrefetchScalarGridSpec(
            num_scalar_prefetch=0,
            grid=(n_chunks,),  # stream the time axis, chunk by chunk
            in_specs=[
                pl.BlockSpec((chunk, b_pad, 4 * H), lambda c: (c, 0, 0)),
                pl.BlockSpec((H, 4 * H), lambda c: (0, 0)),
            ],
            out_specs=pl.BlockSpec((b_pad, H), lambda c: (0, 0)),
            scratch_shapes=[
                pltpu.VMEM((b_pad, H), f32),   # h state (persists across chunks)
                pltpu.VMEM((b_pad, H), f32),   # c state
            ],
        ),
        compiler_params=pltpu.CompilerParams(
            dimension_semantics=("arbitrary",),   # serial recurrence axis
            vmem_limit_bytes=vmem_limit,
        ),
    )(gates_x, whh_T)

    # hidden[-1] -> reshape to (batch, 1, hid); drop batch padding.
    return h_last[:batch].reshape(batch, 1, H)


def _lstm_reference(x, w_ih, w_hh, b_ih, b_hh, hidden_size):
    """Pure-JAX reference of the same forward (sanity check)."""
    x_t = jnp.transpose(x, (2, 0, 1)).astype(jnp.float32)  # (seq, B, N)
    seq, batch, _ = x_t.shape
    H = hidden_size
    h = jnp.zeros((batch, H), jnp.float32)
    c = jnp.zeros((batch, H), jnp.float32)
    for t in range(seq):
        gates = x_t[t] @ w_ih.T + h @ w_hh.T + b_ih + b_hh
        i = jax.nn.sigmoid(gates[:, 0 * H:1 * H])
        f = jax.nn.sigmoid(gates[:, 1 * H:2 * H])
        g = jnp.tanh(gates[:, 2 * H:3 * H])
        o = jax.nn.sigmoid(gates[:, 3 * H:4 * H])
        c = f * c + i * g
        h = o * jnp.tanh(c)
    return h.reshape(batch, 1, H)


if __name__ == "__main__":
    # Small shapes consistent with the module's forward:
    batch, n_cols, seq = 2, 4, 8
    hidden_size = 32
    output_horizon = 4  # unused in forward (matches the PyTorch module)

    key = jax.random.PRNGKey(0)
    kx, k1, k2, k3, k4 = jax.random.split(key, 5)

    # PyTorch LSTM-style uniform(-1/sqrt(H), 1/sqrt(H)) init.
    bound = 1.0 / (hidden_size ** 0.5)
    w_ih = jax.random.uniform(k1, (4 * hidden_size, n_cols), jnp.float32, -bound, bound)
    w_hh = jax.random.uniform(k2, (4 * hidden_size, hidden_size), jnp.float32, -bound, bound)
    b_ih = jax.random.uniform(k3, (4 * hidden_size,), jnp.float32, -bound, bound)
    b_hh = jax.random.uniform(k4, (4 * hidden_size,), jnp.float32, -bound, bound)

    x = jax.random.normal(kx, (batch, n_cols, seq), jnp.float32)

    out = lstm_forward(x, w_ih, w_hh, b_ih, b_hh, hidden_size=hidden_size)
    out = jax.block_until_ready(out)

    ref = _lstm_reference(x, w_ih, w_hh, b_ih, b_hh, hidden_size)
    assert out.shape == (batch, 1, hidden_size), out.shape
    assert jnp.allclose(out, ref, atol=1e-4, rtol=1e-4), float(jnp.max(jnp.abs(out - ref)))

    print("KERNEL_OK")
</pallas_src>

<mosaic_0001>
module attributes {stable_mosaic.version = 11 : i64} {
  func.func @_lstm_chunk_kernel(%arg0: i32, %arg1: memref<8x8x128xf32, #tpu.memory_space<vmem>>, %arg2: memref<32x128xf32, #tpu.memory_space<vmem>>, %arg3: memref<8x32xf32, #tpu.memory_space<vmem>>, %arg4: memref<8x32xf32, #tpu.memory_space<vmem>>, %arg5: memref<8x32xf32, #tpu.memory_space<vmem>>) attributes {dimension_semantics = [#tpu.dimension_semantics<arbitrary>], iteration_bounds = array<i64: 1>, scalar_prefetch = 0 : i64, scratch_operands = 2 : i64, tpu.core_type = #tpu.core_type<tc>, window_params = [{transform_indices = @transform_0, window_bounds = array<i64: 8, 8, 128>}, {pipeline_mode = #tpu.pipeline_mode<synchronous>, transform_indices = @transform_1, window_bounds = array<i64: 32, 128>}, {pipeline_mode = #tpu.pipeline_mode<synchronous>, transform_indices = @transform_2, window_bounds = array<i64: 8, 32>}]} {
    %c0_i32 = arith.constant 0 : i32
    %0 = arith.cmpi eq, %arg0, %c0_i32 : i32
    %1 = arith.extui %0 : i1 to i32
    %c0_i32_0 = arith.constant 0 : i32
    %2 = arith.cmpi ne, %1, %c0_i32_0 : i32
    scf.if %2 {
      %cst_44 = arith.constant 0.000000e+00 : f32
      %171 = vector.broadcast %cst_44 : f32 to vector<8x32xf32>
      %c0_45 = arith.constant 0 : index
      %c0_46 = arith.constant 0 : index
      %172 = vector.load %arg4[%c0_45, %c0_46] : memref<8x32xf32, #tpu.memory_space<vmem>>, vector<8x32xf32>
      tpu.vector_store %arg4[%c0_45, %c0_46], %171 {strides = array<i32>} : memref<8x32xf32, #tpu.memory_space<vmem>>, vector<8x32xf32>,
      %cst_47 = arith.constant 0.000000e+00 : f32
      %173 = vector.broadcast %cst_47 : f32 to vector<8x32xf32>
      %c0_48 = arith.constant 0 : index
      %c0_49 = arith.constant 0 : index
      %174 = vector.load %arg5[%c0_48, %c0_49] : memref<8x32xf32, #tpu.memory_space<vmem>>, vector<8x32xf32>
      tpu.vector_store %arg5[%c0_48, %c0_49], %173 {strides = array<i32>} : memref<8x32xf32, #tpu.memory_space<vmem>>, vector<8x32xf32>,
    } else {
    }
    %c0 = arith.constant 0 : index
    %c0_1 = arith.constant 0 : index
    %3 = vector.load %arg2[%c0, %c0_1] : memref<32x128xf32, #tpu.memory_space<vmem>>, vector<32x128xf32>
    %c0_2 = arith.constant 0 : index
    %c0_3 = arith.constant 0 : index
    %4 = vector.load %arg4[%c0_2, %c0_3] : memref<8x32xf32, #tpu.memory_space<vmem>>, vector<8x32xf32>
    %c0_4 = arith.constant 0 : index
    %c0_5 = arith.constant 0 : index
    %5 = vector.load %arg5[%c0_4, %c0_5] : memref<8x32xf32, #tpu.memory_space<vmem>>, vector<8x32xf32>
    %c0_i32_6 = arith.constant 0 : i32
    %6 = arith.index_cast %c0_i32_6 : i32 to index
    %c0_7 = arith.constant 0 : index
    %c0_8 = arith.constant 0 : index
    %7 = vector.load %arg1[%6, %c0_7, %c0_8] : memref<8x8x128xf32, #tpu.memory_space<vmem>>, vector<1x8x128xf32>
    %8 = vector.shape_cast %7 : vector<1x8x128xf32> to vector<8x128xf32>
    %cst = arith.constant dense<0.000000e+00> : vector<8x128xf32>
    %9 = tpu.matmul %4, %3, %cst {dimension_numbers = #tpu.dot_dimension_numbers<[1], [0], [0], [1], [0, 0, 1, 1], [], []>} : vector<8x32xf32>, vector<32x128xf32>, vector<8x128xf32> -> vector<8x128xf32>
    %10 = arith.addf %8, %9 : vector<8x128xf32>
    %11 = arith.negf %10 : vector<8x128xf32>
    %12 = math.exp %11 : vector<8x128xf32>
    %cst_9 = arith.constant 1.000000e+00 : f32
    %13 = vector.broadcast %cst_9 : f32 to vector<8x128xf32>
    %14 = arith.addf %13, %12 : vector<8x128xf32>
    %15 = arith.divf %13, %14 : vector<8x128xf32>
    %16 = math.tanh %10 : vector<8x128xf32>
    %17 = vector.extract_strided_slice %15 {offsets = [0, 0], sizes = [8, 32], strides = [1, 1]} : vector<8x128xf32> to vector<8x32xf32>
    %18 = vector.extract_strided_slice %15 {offsets = [0, 32], sizes = [8, 32], strides = [1, 1]} : vector<8x128xf32> to vector<8x32xf32>
    %19 = vector.extract_strided_slice %16 {offsets = [0, 64], sizes = [8, 32], strides = [1, 1]} : vector<8x128xf32> to vector<8x32xf32>
    %20 = vector.extract_strided_slice %15 {offsets = [0, 96], sizes = [8, 32], strides = [1, 1]} : vector<8x128xf32> to vector<8x32xf32>
    %21 = arith.mulf %18, %5 : vector<8x32xf32>
    %22 = arith.mulf %17, %19 : vector<8x32xf32>
    %23 = arith.addf %21, %22 : vector<8x32xf32>
    %24 = math.tanh %23 : vector<8x32xf32>
    %25 = arith.mulf %20, %24 : vector<8x32xf32>
    %c1_i32 = arith.constant 1 : i32
    %26 = arith.index_cast %c1_i32 : i32 to index
    %c0_10 = arith.constant 0 : index
    %c0_11 = arith.constant 0 : index
    %27 = vector.load %arg1[%26, %c0_10, %c0_11] : memref<8x8x128xf32, #tpu.memory_space<vmem>>, vector<1x8x128xf32>
    %28 = vector.shape_cast %27 : vector<1x8x128xf32> to vector<8x128xf32>
    %cst_12 = arith.constant dense<0.000000e+00> : vector<8x128xf32>
    %29 = tpu.matmul %25, %3, %cst_12 {dimension_numbers = #tpu.dot_dimension_numbers<[1], [0], [0], [1], [0, 0, 1, 1], [], []>} : vector<8x32xf32>, vector<32x128xf32>, vector<8x128xf32> -> vector<8x128xf32>
    %30 = arith.addf %28, %29 : vector<8x128xf32>
    %31 = arith.negf %30 : vector<8x128xf32>
    %32 = math.exp %31 : vector<8x128xf32>
    %cst_13 = arith.constant 1.000000e+00 : f32
    %33 = vector.broadcast %cst_13 : f32 to vector<8x128xf32>
    %34 = arith.addf %33, %32 : vector<8x128xf32>
    %35 = arith.divf %33, %34 : vector<8x128xf32>
    %36 = math.tanh %30 : vector<8x128xf32>
    %37 = vector.extract_strided_slice %35 {offsets = [0, 0], sizes = [8, 32], strides = [1, 1]} : vector<8x128xf32> to vector<8x32xf32>
    %38 = vector.extract_strided_slice %35 {offsets = [0, 32], sizes = [8, 32], strides = [1, 1]} : vector<8x128xf32> to vector<8x32xf32>
    %39 = vector.extract_strided_slice %36 {offsets = [0, 64], sizes = [8, 32], strides = [1, 1]} : vector<8x128xf32> to vector<8x32xf32>
    %40 = vector.extract_strided_slice %35 {offsets = [0, 96], sizes = [8, 32], strides = [1, 1]} : vector<8x128xf32> to vector<8x32xf32>
    %41 = arith.mulf %38, %23 : vector<8x32xf32>
    %42 = arith.mulf %37, %39 : vector<8x32xf32>
    %43 = arith.addf %41, %42 : vector<8x32xf32>
    %44 = math.tanh %43 : vector<8x32xf32>
    %45 = arith.mulf %40, %44 : vector<8x32xf32>
    %c2_i32 = arith.constant 2 : i32
    %46 = arith.index_cast %c2_i32 : i32 to index
    %c0_14 = arith.constant 0 : index
    %c0_15 = arith.constant 0 : index
    %47 = vector.load %arg1[%46, %c0_14, %c0_15] : memref<8x8x128xf32, #tpu.memory_space<vmem>>, vector<1x8x128xf32>
    %48 = vector.shape_cast %47 : vector<1x8x128xf32> to vector<8x128xf32>
    %cst_16 = arith.constant dense<0.000000e+00> : vector<8x128xf32>
    %49 = tpu.matmul %45, %3, %cst_16 {dimension_numbers = #tpu.dot_dimension_numbers<[1], [0], [0], [1], [0, 0, 1, 1], [], []>} : vector<8x32xf32>, vector<32x128xf32>, vector<8x128xf32> -> vector<8x128xf32>
    %50 = arith.addf %48, %49 : vector<8x128xf32>
    %51 = arith.negf %50 : vector<8x128xf32>
    %52 = math.exp %51 : vector<8x128xf32>
    %cst_17 = arith.constant 1.000000e+00 : f32
    %53 = vector.broadcast %cst_17 : f32 to vector<8x128xf32>
    %54 = arith.addf %53, %52 : vector<8x128xf32>
    %55 = arith.divf %53, %54 : vector<8x128xf32>
    %56 = math.tanh %50 : vector<8x128xf32>
    %57 = vector.extract_strided_slice %55 {offsets = [0, 0], sizes = [8, 32], strides = [1, 1]} : vector<8x128xf32> to vector<8x32xf32>
    %58 = vector.extract_strided_slice %55 {offsets = [0, 32], sizes = [8, 32], strides = [1, 1]} : vector<8x128xf32> to vector<8x32xf32>
    %59 = vector.extract_strided_slice %56 {offsets = [0, 64], sizes = [8, 32], strides = [1, 1]} : vector<8x128xf32> to vector<8x32xf32>
    %60 = vector.extract_strided_slice %55 {offsets = [0, 96], sizes = [8, 32], strides = [1, 1]} : vector<8x128xf32> to vector<8x32xf32>
    %61 = arith.mulf %58, %43 : vector<8x32xf32>
    %62 = arith.mulf %57, %59 : vector<8x32xf32>
    %63 = arith.addf %61, %62 : vector<8x32xf32>
    %64 = math.tanh %63 : vector<8x32xf32>
    %65 = arith.mulf %60, %64 : vector<8x32xf32>
    %c3_i32 = arith.constant 3 : i32
    %66 = arith.index_cast %c3_i32 : i32 to index
    %c0_18 = arith.constant 0 : index
    %c0_19 = arith.constant 0 : index
    %67 = vector.load %arg1[%66, %c0_18, %c0_19] : memref<8x8x128xf32, #tpu.memory_space<vmem>>, vector<1x8x128xf32>
    %68 = vector.shape_cast %67 : vector<1x8x128xf32> to vector<8x128xf32>
    %cst_20 = arith.constant dense<0.000000e+00> : vector<8x128xf32>
    %69 = tpu.matmul %65, %3, %cst_20 {dimension_numbers = #tpu.dot_dimension_numbers<[1], [0], [0], [1], [0, 0, 1, 1], [], []>} : vector<8x32xf32>, vector<32x128xf32>, vector<8x128xf32> -> vector<8x128xf32>
    %70 = arith.addf %68, %69 : vector<8x128xf32>
    %71 = arith.negf %70 : vector<8x128xf32>
    %72 = math.exp %71 : vector<8x128xf32>
    %cst_21 = arith.constant 1.000000e+00 : f32
    %73 = vector.broadcast %cst_21 : f32 to vector<8x128xf32>
    %74 = arith.addf %73, %72 : vector<8x128xf32>
    %75 = arith.divf %73, %74 : vector<8x128xf32>
    %76 = math.tanh %70 : vector<8x128xf32>
    %77 = vector.extract_strided_slice %75 {offsets = [0, 0], sizes = [8, 32], strides = [1, 1]} : vector<8x128xf32> to vector<8x32xf32>
    %78 = vector.extract_strided_slice %75 {offsets = [0, 32], sizes = [8, 32], strides = [1, 1]} : vector<8x128xf32> to vector<8x32xf32>
    %79 = vector.extract_strided_slice %76 {offsets = [0, 64], sizes = [8, 32], strides = [1, 1]} : vector<8x128xf32> to vector<8x32xf32>
    %80 = vector.extract_strided_slice %75 {offsets = [0, 96], sizes = [8, 32], strides = [1, 1]} : vector<8x128xf32> to vector<8x32xf32>
    %81 = arith.mulf %78, %63 : vector<8x32xf32>
    %82 = arith.mulf %77, %79 : vector<8x32xf32>
    %83 = arith.addf %81, %82 : vector<8x32xf32>
    %84 = math.tanh %83 : vector<8x32xf32>
    %85 = arith.mulf %80, %84 : vector<8x32xf32>
    %c4_i32 = arith.constant 4 : i32
    %86 = arith.index_cast %c4_i32 : i32 to index
    %c0_22 = arith.constant 0 : index
    %c0_23 = arith.constant 0 : index
    %87 = vector.load %arg1[%86, %c0_22, %c0_23] : memref<8x8x128xf32, #tpu.memory_space<vmem>>, vector<1x8x128xf32>
    %88 = vector.shape_cast %87 : vector<1x8x128xf32> to vector<8x128xf32>
    %cst_24 = arith.constant dense<0.000000e+00> : vector<8x128xf32>
    %89 = tpu.matmul %85, %3, %cst_24 {dimension_numbers = #tpu.dot_dimension_numbers<[1], [0], [0], [1], [0, 0, 1, 1], [], []>} : vector<8x32xf32>, vector<32x128xf32>, vector<8x128xf32> -> vector<8x128xf32>
    %90 = arith.addf %88, %89 : vector<8x128xf32>
    %91 = arith.negf %90 : vector<8x128xf32>
    %92 = math.exp %91 : vector<8x128xf32>
    %cst_25 = arith.constant 1.000000e+00 : f32
    %93 = vector.broadcast %cst_25 : f32 to vector<8x128xf32>
    %94 = arith.addf %93, %92 : vector<8x128xf32>
    %95 = arith.divf %93, %94 : vector<8x128xf32>
    %96 = math.tanh %90 : vector<8x128xf32>
    %97 = vector.extract_strided_slice %95 {offsets = [0, 0], sizes = [8, 32], strides = [1, 1]} : vector<8x128xf32> to vector<8x32xf32>
    %98 = vector.extract_strided_slice %95 {offsets = [0, 32], sizes = [8, 32], strides = [1, 1]} : vector<8x128xf32> to vector<8x32xf32>
    %99 = vector.extract_strided_slice %96 {offsets = [0, 64], sizes = [8, 32], strides = [1, 1]} : vector<8x128xf32> to vector<8x32xf32>
    %100 = vector.extract_strided_slice %95 {offsets = [0, 96], sizes = [8, 32], strides = [1, 1]} : vector<8x128xf32> to vector<8x32xf32>
    %101 = arith.mulf %98, %83 : vector<8x32xf32>
    %102 = arith.mulf %97, %99 : vector<8x32xf32>
    %103 = arith.addf %101, %102 : vector<8x32xf32>
    %104 = math.tanh %103 : vector<8x32xf32>
    %105 = arith.mulf %100, %104 : vector<8x32xf32>
    %c5_i32 = arith.constant 5 : i32
    %106 = arith.index_cast %c5_i32 : i32 to index
    %c0_26 = arith.constant 0 : index
    %c0_27 = arith.constant 0 : index
    %107 = vector.load %arg1[%106, %c0_26, %c0_27] : memref<8x8x128xf32, #tpu.memory_space<vmem>>, vector<1x8x128xf32>
    %108 = vector.shape_cast %107 : vector<1x8x128xf32> to vector<8x128xf32>
    %cst_28 = arith.constant dense<0.000000e+00> : vector<8x128xf32>
    %109 = tpu.matmul %105, %3, %cst_28 {dimension_numbers = #tpu.dot_dimension_numbers<[1], [0], [0], [1], [0, 0, 1, 1], [], []>} : vector<8x32xf32>, vector<32x128xf32>, vector<8x128xf32> -> vector<8x128xf32>
    %110 = arith.addf %108, %109 : vector<8x128xf32>
    %111 = arith.negf %110 : vector<8x128xf32>
    %112 = math.exp %111 : vector<8x128xf32>
    %cst_29 = arith.constant 1.000000e+00 : f32
    %113 = vector.broadcast %cst_29 : f32 to vector<8x128xf32>
    %114 = arith.addf %113, %112 : vector<8x128xf32>
    %115 = arith.divf %113, %114 : vector<8x128xf32>
    %116 = math.tanh %110 : vector<8x128xf32>
    %117 = vector.extract_strided_slice %115 {offsets = [0, 0], sizes = [8, 32], strides = [1, 1]} : vector<8x128xf32> to vector<8x32xf32>
    %118 = vector.extract_strided_slice %115 {offsets = [0, 32], sizes = [8, 32], strides = [1, 1]} : vector<8x128xf32> to vector<8x32xf32>
    %119 = vector.extract_strided_slice %116 {offsets = [0, 64], sizes = [8, 32], strides = [1, 1]} : vector<8x128xf32> to vector<8x32xf32>
    %120 = vector.extract_strided_slice %115 {offsets = [0, 96], sizes = [8, 32], strides = [1, 1]} : vector<8x128xf32> to vector<8x32xf32>
    %121 = arith.mulf %118, %103 : vector<8x32xf32>
    %122 = arith.mulf %117, %119 : vector<8x32xf32>
    %123 = arith.addf %121, %122 : vector<8x32xf32>
    %124 = math.tanh %123 : vector<8x32xf32>
    %125 = arith.mulf %120, %124 : vector<8x32xf32>
    %c6_i32 = arith.constant 6 : i32
    %126 = arith.index_cast %c6_i32 : i32 to index
    %c0_30 = arith.constant 0 : index
    %c0_31 = arith.constant 0 : index
    %127 = vector.load %arg1[%126, %c0_30, %c0_31] : memref<8x8x128xf32, #tpu.memory_space<vmem>>, vector<1x8x128xf32>
    %128 = vector.shape_cast %127 : vector<1x8x128xf32> to vector<8x128xf32>
    %cst_32 = arith.constant dense<0.000000e+00> : vector<8x128xf32>
    %129 = tpu.matmul %125, %3, %cst_32 {dimension_numbers = #tpu.dot_dimension_numbers<[1], [0], [0], [1], [0, 0, 1, 1], [], []>} : vector<8x32xf32>, vector<32x128xf32>, vector<8x128xf32> -> vector<8x128xf32>
    %130 = arith.addf %128, %129 : vector<8x128xf32>
    %131 = arith.negf %130 : vector<8x128xf32>
    %132 = math.exp %131 : vector<8x128xf32>
    %cst_33 = arith.constant 1.000000e+00 : f32
    %133 = vector.broadcast %cst_33 : f32 to vector<8x128xf32>
    %134 = arith.addf %133, %132 : vector<8x128xf32>
    %135 = arith.divf %133, %134 : vector<8x128xf32>
    %136 = math.tanh %130 : vector<8x128xf32>
    %137 = vector.extract_strided_slice %135 {offsets = [0, 0], sizes = [8, 32], strides = [1, 1]} : vector<8x128xf32> to vector<8x32xf32>
    %138 = vector.extract_strided_slice %135 {offsets = [0, 32], sizes = [8, 32], strides = [1, 1]} : vector<8x128xf32> to vector<8x32xf32>
    %139 = vector.extract_strided_slice %136 {offsets = [0, 64], sizes = [8, 32], strides = [1, 1]} : vector<8x128xf32> to vector<8x32xf32>
    %140 = vector.extract_strided_slice %135 {offsets = [0, 96], sizes = [8, 32], strides = [1, 1]} : vector<8x128xf32> to vector<8x32xf32>
    %141 = arith.mulf %138, %123 : vector<8x32xf32>
    %142 = arith.mulf %137, %139 : vector<8x32xf32>
    %143 = arith.addf %141, %142 : vector<8x32xf32>
    %144 = math.tanh %143 : vector<8x32xf32>
    %145 = arith.mulf %140, %144 : vector<8x32xf32>
    %c7_i32 = arith.constant 7 : i32
    %146 = arith.index_cast %c7_i32 : i32 to index
    %c0_34 = arith.constant 0 : index
    %c0_35 = arith.constant 0 : index
    %147 = vector.load %arg1[%146, %c0_34, %c0_35] : memref<8x8x128xf32, #tpu.memory_space<vmem>>, vector<1x8x128xf32>
    %148 = vector.shape_cast %147 : vector<1x8x128xf32> to vector<8x128xf32>
    %cst_36 = arith.constant dense<0.000000e+00> : vector<8x128xf32>
    %149 = tpu.matmul %145, %3, %cst_36 {dimension_numbers = #tpu.dot_dimension_numbers<[1], [0], [0], [1], [0, 0, 1, 1], [], []>} : vector<8x32xf32>, vector<32x128xf32>, vector<8x128xf32> -> vector<8x128xf32>
    %150 = arith.addf %148, %149 : vector<8x128xf32>
    %151 = arith.negf %150 : vector<8x128xf32>
    %152 = math.exp %151 : vector<8x128xf32>
    %cst_37 = arith.constant 1.000000e+00 : f32
    %153 = vector.broadcast %cst_37 : f32 to vector<8x128xf32>
    %154 = arith.addf %153, %152 : vector<8x128xf32>
    %155 = arith.divf %153, %154 : vector<8x128xf32>
    %156 = math.tanh %150 : vector<8x128xf32>
    %157 = vector.extract_strided_slice %155 {offsets = [0, 0], sizes = [8, 32], strides = [1, 1]} : vector<8x128xf32> to vector<8x32xf32>
    %158 = vector.extract_strided_slice %155 {offsets = [0, 32], sizes = [8, 32], strides = [1, 1]} : vector<8x128xf32> to vector<8x32xf32>
    %159 = vector.extract_strided_slice %156 {offsets = [0, 64], sizes = [8, 32], strides = [1, 1]} : vector<8x128xf32> to vector<8x32xf32>
    %160 = vector.extract_strided_slice %155 {offsets = [0, 96], sizes = [8, 32], strides = [1, 1]} : vector<8x128xf32> to vector<8x32xf32>
    %161 = arith.mulf %158, %143 : vector<8x32xf32>
    %162 = arith.mulf %157, %159 : vector<8x32xf32>
    %163 = arith.addf %161, %162 : vector<8x32xf32>
    %164 = math.tanh %163 : vector<8x32xf32>
    %165 = arith.mulf %160, %164 : vector<8x32xf32>
    %c8_i32 = arith.constant 8 : i32
    %c0_38 = arith.constant 0 : index
    %c0_39 = arith.constant 0 : index
    %166 = vector.load %arg4[%c0_38, %c0_39] : memref<8x32xf32, #tpu.memory_space<vmem>>, vector<8x32xf32>
    tpu.vector_store %arg4[%c0_38, %c0_39], %165 {strides = array<i32>} : memref<8x32xf32, #tpu.memory_space<vmem>>, vector<8x32xf32>,
    %c0_40 = arith.constant 0 : index
    %c0_41 = arith.constant 0 : index
    %167 = vector.load %arg5[%c0_40, %c0_41] : memref<8x32xf32, #tpu.memory_space<vmem>>, vector<8x32xf32>
    tpu.vector_store %arg5[%c0_40, %c0_41], %163 {strides = array<i32>} : memref<8x32xf32, #tpu.memory_space<vmem>>, vector<8x32xf32>,
    %c0_i32_42 = arith.constant 0 : i32
    %168 = arith.cmpi eq, %arg0, %c0_i32_42 : i32
    %169 = arith.extui %168 : i1 to i32
    %c0_i32_43 = arith.constant 0 : i32
    %170 = arith.cmpi ne, %169, %c0_i32_43 : i32
    scf.if %170 {
      %c0_44 = arith.constant 0 : index
      %c0_45 = arith.constant 0 : index
      %171 = vector.load %arg3[%c0_44, %c0_45] : memref<8x32xf32, #tpu.memory_space<vmem>>, vector<8x32xf32>
      tpu.vector_store %arg3[%c0_44, %c0_45], %165 {strides = array<i32>} : memref<8x32xf32, #tpu.memory_space<vmem>>, vector<8x32xf32>,
    } else {
    }
    return
  }
  func.func @transform_0(%arg0: i32) -> (i32, i32, i32) {
    %c0_i32 = arith.constant 0 : i32
    %c0_i32_0 = arith.constant 0 : i32
    %c0_i32_1 = arith.constant 0 : i32
    return %arg0, %c0_i32, %c0_i32_0 : i32, i32, i32
  }
  func.func @transform_1(%arg0: i32) -> (i32, i32) {
    %c0_i32 = arith.constant 0 : i32
    %c0_i32_0 = arith.constant 0 : i32
    %c0_i32_1 = arith.constant 0 : i32
    return %c0_i32, %c0_i32_0 : i32, i32
  }
  func.func @transform_2(%arg0: i32) -> (i32, i32) {
    %c0_i32 = arith.constant 0 : i32
    %c0_i32_0 = arith.constant 0 : i32
    %c0_i32_1 = arith.constant 0 : i32
    return %c0_i32, %c0_i32_0 : i32, i32
  }
}

</mosaic_0001>

<llo_original>
// kernel: lstm_forward.1
$region0: #{lstm_forward.1}
  #allocation0 [shape = 'u32[]', space=smem, size = 0x4, offset = 0x4, fixed_abs, tag = 'smem constant byte address 0x4 - core index']
  #allocation1 [shape = 'u32[144,128]{1,0:T(1,128)}', space=vmem, size = 0x12000, scoped, tag = 'internal scratch']
  #allocation2 [shape = 'f32[8,32]{1,0:T(8,128)}', space=vmem, size = 0x1000, scoped, tag = 'scratch operand']
  #allocation3 [shape = 'f32[8,32]{1,0:T(8,128)}', space=vmem, size = 0x1000, scoped, tag = 'scratch operand']
  %s0 = inlined_call_operand.vmem [shape: f32[8,8,128], index: 0, kind: input, shape index: {}]
  %s1 = inlined_call_operand.vmem [shape: f32[32,128], index: 1, kind: input, shape index: {}]
  %s2 = inlined_call_operand.vmem [shape: f32[8,32], index: 2, kind: output, shape index: {}]
  %s3 = sld [smem:[#allocation0]]
  $region26: #{lstm_forward.1} parent=0
    _
  %s5 = ssub.s32 1, %s3
  %s6 = scalar_select 0, %s5, %s3
  // Predicated region
  $region2: #{lstm_forward.1} parent=0 // pred_check
    _
  $region3: #{lstm_forward.1} parent=0 // pred_check_branch
    %8 = sbr.rel (0) target = $region5
  $region4: #{lstm_forward.1} parent=0 // pred_region
    _
  $region5: #{lstm_forward.1} parent=0 // pred_fallthru
    _
  // Predicated region
  $region6: #{lstm_forward.1} parent=0 // pred_check
    _
  $region7: #{lstm_forward.1} parent=0 // pred_check_branch
    %10 = sbr.rel (0) target = $region9
  $region8: #{lstm_forward.1} parent=0 // pred_region
    _
  $region9: #{lstm_forward.1} parent=0 // pred_fallthru
    _
  %p11 = scmp.eq.s32.totalorder 0, 0
  // Predicated region
  $region10: #{lstm_forward.1} parent=0 // pred_check
    %p12 = pneg %p11
  $region11: #{lstm_forward.1} parent=0 // pred_check_branch
    %14 = sbr.rel (%p12) target = $region13
  $region12: #{lstm_forward.1} parent=0 // pred_region
    %vm15 = vcmask 261120
    %16 = vst.msk [vmem:[#allocation2] sm:$0xff] %vm15, 0.0
    %17 = vst.msk [vmem:[#allocation3] sm:$0xff] %vm15, 0.0
  $region13: #{lstm_forward.1} parent=0 // pred_fallthru
    _
  %v18 = vld [vmem:[%s1] sm:$0xff]
  %v19 = vld [vmem:[%s1 + $0x8] sm:$0xff]
  %v20 = vld [vmem:[%s1 + $0x10] sm:$0xff]
  %v21 = vld [vmem:[%s1 + $0x18] sm:$0xff]
  %v22 = vld [vmem:[#allocation2] sm:$0xff]
  %v23 = vld [vmem:[#allocation3] sm:$0xff]
  %v24 = vld [vmem:[%s0] sm:$0xff]
  %vm25 = vcmask 261120
  %v27 = vsel %vm25, %v22, 0
  %29 = vmatprep.subr.mxu0 0.0
  %30 = vmatpush1.msra.mxu0 %v18
  %31 = vmatprep.subr.mxu0 0.0
  %32 = vmatpush1.msra.mxu0 %v19
  %33 = vmatprep.subr.mxu0 0.0
  %34 = vmatpush1.msra.mxu0 %v20
  %35 = vmatprep.subr.mxu0 0.0
  %36 = vmatpush1.msra.mxu0 %v21
  %37 = vmatprep.subr.mxu0 0.0
  %38 = vmatpush1.msra.mxu0 0.0
  %39 = vmatprep.subr.mxu0 0.0
  %40 = vmatpush1.msra.mxu0 0.0
  %41 = vmatprep.subr.mxu0 0.0
  %42 = vmatpush1.msra.mxu0 0.0
  %43 = vmatprep.subr.mxu0 0.0
  %44 = vmatpush1.msra.mxu0 0.0
  %45 = vmatprep.subr.mxu0 0.0
  %46 = vmatpush1.msra.mxu0 0.0
  %47 = vmatprep.subr.mxu0 0.0
  %48 = vmatpush1.msra.mxu0 0.0
  %49 = vmatprep.subr.mxu0 0.0
  %50 = vmatpush1.msra.mxu0 0.0
  %51 = vmatprep.subr.mxu0 0.0
  %52 = vmatpush1.msra.mxu0 0.0
  %53 = vmatprep.subr.mxu0 0.0
  %54 = vmatpush1.msra.mxu0 0.0
  %55 = vmatprep.subr.mxu0 0.0
  %56 = vmatpush1.msra.mxu0 0.0
  %57 = vmatprep.subr.mxu0 0.0
  %58 = vmatpush1.msra.mxu0 0.0
  %59 = vmatprep.subr.mxu0 0.0
  %60 = vmatpush1.msra.mxu0 0.0
  %61 = vmatprep.subr.mxu0 0.0
  %62 = vmatpush1.msra.mxu0 0.0
  %63 = vmatprep.subr.mxu0 0.0
  %64 = vmatpush1.msra.mxu0 0.0
  %65 = vmatprep.subr.mxu0 0.0
  %66 = vmatpush1.msra.mxu0 0.0
  %67 = vmatprep.subr.mxu0 0.0
  %68 = vmatpush1.msra.mxu0 0.0
  %69 = vmatprep.subr.mxu0 0.0
  %70 = vmatpush1.msra.mxu0 0.0
  %71 = vmatprep.subr.mxu0 0.0
  %72 = vmatpush1.msra.mxu0 0.0
  %73 = vmatprep.subr.mxu0 0.0
  %74 = vmatpush1.msra.mxu0 0.0
  %75 = vmatprep.subr.mxu0 0.0
  %76 = vmatpush1.msra.mxu0 0.0
  %77 = vmatprep.subr.mxu0 0.0
  %78 = vmatpush1.msra.mxu0 0.0
  %79 = vmatprep.subr.mxu0 0.0
  %80 = vmatpush1.msra.mxu0 0.0
  %81 = vmatprep.subr.mxu0 0.0
  %82 = vmatpush1.msra.mxu0 0.0
  %83 = vmatprep.subr.mxu0 0.0
  %84 = vmatpush1.msra.mxu0 0.0
  %85 = vmatprep.subr.mxu0 0.0
  %86 = vmatpush1.msra.mxu0 0.0
  %87 = vmatprep.subr.mxu0 0.0
  %88 = vmatpush1.msra.mxu0 0.0
  %89 = vmatprep.subr.mxu0 0.0
  %90 = vmatpush1.msra.mxu0 0.0
  %91 = vmatprep.subr.mxu0 0.0
  %92 = vmatpush1.msra.mxu0 0.0
  %93 = vmatprep.mubr.f32.mxu0 0.0
  %94 = vmatmul.mubr.f32.gmra.mrb[0].mxu0 %v27
  %v95 = vpop.f32.mrb[0].mxu0
  %v96 = vadd.f32 0.0, %v95
  %v97 = vpop.f32.mrb[0].mxu0
  %98 = vdwg.mxu0
  %v99 = vadd.f32 %v24, %v96
  %v100 = vxor.u32 %v99, 2147483648
  %v101 = vmul.f32 %v100, 1.442695
  %v102 = vpow.pop %v101
  %v103 = vadd.f32 %v102, 1.0
  %v104 = vrcp.pop %v103
  %v105 = vmul.f32 1.0, %v104
  %v106 = vtanh.pop %v99
  %108 = vrot.lane.b32.xlu0 %v23, 32
  %v109 = vpop.permute.xlu0 %108
  %v111 = vmul.f32 %v105, %v109
  %113 = vrot.lane.b32.xlu0 %v106, 64
  %v114 = vpop.permute.xlu0 %113
  %v116 = vmul.f32 %v105, %v114
  %118 = vrot.lane.b32.xlu0 %v116, 32
  %v119 = vpop.permute.xlu0 %118
  %v121 = vadd.f32 %v111, %v119
  %v122 = vtanh.pop %v121
  %124 = vrot.lane.b32.xlu0 %v122, 64
  %v125 = vpop.permute.xlu0 %124
  %v127 = vmul.f32 %v105, %v125
  %s128 = scalar_lea.vmem %s0, 8
  %v129 = vld [vmem:[%s128] sm:$0xff]
  %131 = vrot.lane.b32.xlu0 %v127, 32
  %v132 = vpop.permute.xlu0 %131
  %v133 = vsel %vm25, %v132, 0
  %135 = vmatprep.subr.mxu0 0.0
  %136 = vmatpush1.msra.mxu0 %v18
  %137 = vmatprep.subr.mxu0 0.0
  %138 = vmatpush1.msra.mxu0 %v19
  %139 = vmatprep.subr.mxu0 0.0
  %140 = vmatpush1.msra.mxu0 %v20
  %141 = vmatprep.subr.mxu0 0.0
  %142 = vmatpush1.msra.mxu0 %v21
  %143 = vmatprep.subr.mxu0 0.0
  %144 = vmatpush1.msra.mxu0 0.0
  %145 = vmatprep.subr.mxu0 0.0
  %146 = vmatpush1.msra.mxu0 0.0
  %147 = vmatprep.subr.mxu0 0.0
  %148 = vmatpush1.msra.mxu0 0.0
  %149 = vmatprep.subr.mxu0 0.0
  %150 = vmatpush1.msra.mxu0 0.0
  %151 = vmatprep.subr.mxu0 0.0
  %152 = vmatpush1.msra.mxu0 0.0
  %153 = vmatprep.subr.mxu0 0.0
  %154 = vmatpush1.msra.mxu0 0.0
  %155 = vmatprep.subr.mxu0 0.0
  %156 = vmatpush1.msra.mxu0 0.0
  %157 = vmatprep.subr.mxu0 0.0
  %158 = vmatpush1.msra.mxu0 0.0
  %159 = vmatprep.subr.mxu0 0.0
  %160 = vmatpush1.msra.mxu0 0.0
  %161 = vmatprep.subr.mxu0 0.0
  %162 = vmatpush1.msra.mxu0 0.0
  %163 = vmatprep.subr.mxu0 0.0
  %164 = vmatpush1.msra.mxu0 0.0
  %165 = vmatprep.subr.mxu0 0.0
  %166 = vmatpush1.msra.mxu0 0.0
  %167 = vmatprep.subr.mxu0 0.0
  %168 = vmatpush1.msra.mxu0 0.0
  %169 = vmatprep.subr.mxu0 0.0
  %170 = vmatpush1.msra.mxu0 0.0
  %171 = vmatprep.subr.mxu0 0.0
  %172 = vmatpush1.msra.mxu0 0.0
  %173 = vmatprep.subr.mxu0 0.0
  %174 = vmatpush1.msra.mxu0 0.0
  %175 = vmatprep.subr.mxu0 0.0
  %176 = vmatpush1.msra.mxu0 0.0
  %177 = vmatprep.subr.mxu0 0.0
  %178 = vmatpush1.msra.mxu0 0.0
  %179 = vmatprep.subr.mxu0 0.0
  %180 = vmatpush1.msra.mxu0 0.0
  %181 = vmatprep.subr.mxu0 0.0
  %182 = vmatpush1.msra.mxu0 0.0
  %183 = vmatprep.subr.mxu0 0.0
  %184 = vmatpush1.msra.mxu0 0.0
  %185 = vmatprep.subr.mxu0 0.0
  %186 = vmatpush1.msra.mxu0 0.0
  %187 = vmatprep.subr.mxu0 0.0
  %188 = vmatpush1.msra.mxu0 0.0
  %189 = vmatprep.subr.mxu0 0.0
  %190 = vmatpush1.msra.mxu0 0.0
  %191 = vmatprep.subr.mxu0 0.0
  %192 = vmatpush1.msra.mxu0 0.0
  %193 = vmatprep.subr.mxu0 0.0
  %194 = vmatpush1.msra.mxu0 0.0
  %195 = vmatprep.subr.mxu0 0.0
  %196 = vmatpush1.msra.mxu0 0.0
  %197 = vmatprep.subr.mxu0 0.0
  %198 = vmatpush1.msra.mxu0 0.0
  %199 = vmatprep.mubr.f32.mxu0 0.0
  %200 = vmatmul.mubr.f32.gmra.mrb[0].mxu0 %v133
  %v201 = vpop.f32.mrb[0].mxu0
  %v202 = vadd.f32 0.0, %v201
  %v203 = vpop.f32.mrb[0].mxu0
  %204 = vdwg.mxu0
  %v205 = vadd.f32 %v129, %v202
  %v206 = vxor.u32 %v205, 2147483648
  %v207 = vmul.f32 %v206, 1.442695
  %v208 = vpow.pop %v207
  %v209 = vadd.f32 %v208, 1.0
  %v210 = vrcp.pop %v209
  %v211 = vmul.f32 1.0, %v210
  %v212 = vtanh.pop %v205
  %v213 = vmul.f32 %v211, %v121
  %215 = vrot.lane.b32.xlu0 %v212, 64
  %v216 = vpop.permute.xlu0 %215
  %v218 = vmul.f32 %v211, %v216
  %220 = vrot.lane.b32.xlu0 %v218, 32
  %v221 = vpop.permute.xlu0 %220
  %v223 = vadd.f32 %v213, %v221
  %v224 = vtanh.pop %v223
  %226 = vrot.lane.b32.xlu0 %v224, 64
  %v227 = vpop.permute.xlu0 %226
  %v229 = vmul.f32 %v211, %v227
  %s230 = scalar_lea.vmem %s0, 16
  %v231 = vld [vmem:[%s230] sm:$0xff]
  %233 = vrot.lane.b32.xlu0 %v229, 32
  %v234 = vpop.permute.xlu0 %233
  %v235 = vsel %vm25, %v234, 0
  %237 = vmatprep.subr.mxu0 0.0
  %238 = vmatpush1.msra.mxu0 %v18
  %239 = vmatprep.subr.mxu0 0.0
  %240 = vmatpush1.msra.mxu0 %v19
  %241 = vmatprep.subr.mxu0 0.0
  %242 = vmatpush1.msra.mxu0 %v20
  %243 = vmatprep.subr.mxu0 0.0
  %244 = vmatpush1.msra.mxu0 %v21
  %245 = vmatprep.subr.mxu0 0.0
  %246 = vmatpush1.msra.mxu0 0.0
  %247 = vmatprep.subr.mxu0 0.0
  %248 = vmatpush1.msra.mxu0 0.0
  %249 = vmatprep.subr.mxu0 0.0
  %250 = vmatpush1.msra.mxu0 0.0
  %251 = vmatprep.subr.mxu0 0.0
  %252 = vmatpush1.msra.mxu0 0.0
  %253 = vmatprep.subr.mxu0 0.0
  %254 = vmatpush1.msra.mxu0 0.0
  %255 = vmatprep.subr.mxu0 0.0
  %256 = vmatpush1.msra.mxu0 0.0
  %257 = vmatprep.subr.mxu0 0.0
  %258 = vmatpush1.msra.mxu0 0.0
  %259 = vmatprep.subr.mxu0 0.0
  %260 = vmatpush1.msra.mxu0 0.0
  %261 = vmatprep.subr.mxu0 0.0
  %262 = vmatpush1.msra.mxu0 0.0
  %263 = vmatprep.subr.mxu0 0.0
  %264 = vmatpush1.msra.mxu0 0.0
  %265 = vmatprep.subr.mxu0 0.0
  %266 = vmatpush1.msra.mxu0 0.0
  %267 = vmatprep.subr.mxu0 0.0
  %268 = vmatpush1.msra.mxu0 0.0
  %269 = vmatprep.subr.mxu0 0.0
  %270 = vmatpush1.msra.mxu0 0.0
  %271 = vmatprep.subr.mxu0 0.0
  %272 = vmatpush1.msra.mxu0 0.0
  %273 = vmatprep.subr.mxu0 0.0
  %274 = vmatpush1.msra.mxu0 0.0
  %275 = vmatprep.subr.mxu0 0.0
  %276 = vmatpush1.msra.mxu0 0.0
  %277 = vmatprep.subr.mxu0 0.0
  %278 = vmatpush1.msra.mxu0 0.0
  %279 = vmatprep.subr.mxu0 0.0
  %280 = vmatpush1.msra.mxu0 0.0
  %281 = vmatprep.subr.mxu0 0.0
  %282 = vmatpush1.msra.mxu0 0.0
  %283 = vmatprep.subr.mxu0 0.0
  %284 = vmatpush1.msra.mxu0 0.0
  %285 = vmatprep.subr.mxu0 0.0
  %286 = vmatpush1.msra.mxu0 0.0
  %287 = vmatprep.subr.mxu0 0.0
  %288 = vmatpush1.msra.mxu0 0.0
  %289 = vmatprep.subr.mxu0 0.0
  %290 = vmatpush1.msra.mxu0 0.0
  %291 = vmatprep.subr.mxu0 0.0
  %292 = vmatpush1.msra.mxu0 0.0
  %293 = vmatprep.subr.mxu0 0.0
  %294 = vmatpush1.msra.mxu0 0.0
  %295 = vmatprep.subr.mxu0 0.0
  %296 = vmatpush1.msra.mxu0 0.0
  %297 = vmatprep.subr.mxu0 0.0
  %298 = vmatpush1.msra.mxu0 0.0
  %299 = vmatprep.subr.mxu0 0.0
  %300 = vmatpush1.msra.mxu0 0.0
  %301 = vmatprep.mubr.f32.mxu0 0.0
  %302 = vmatmul.mubr.f32.gmra.mrb[0].mxu0 %v235
  %v303 = vpop.f32.mrb[0].mxu0
  %v304 = vadd.f32 0.0, %v303
  %v305 = vpop.f32.mrb[0].mxu0
  %306 = vdwg.mxu0
  %v307 = vadd.f32 %v231, %v304
  %v308 = vxor.u32 %v307, 2147483648
  %v309 = vmul.f32 %v308, 1.442695
  %v310 = vpow.pop %v309
  %v311 = vadd.f32 %v310, 1.0
  %v312 = vrcp.pop %v311
  %v313 = vmul.f32 1.0, %v312
  %v314 = vtanh.pop %v307
  %v315 = vmul.f32 %v313, %v223
  %317 = vrot.lane.b32.xlu0 %v314, 64
  %v318 = vpop.permute.xlu0 %317
  %v320 = vmul.f32 %v313, %v318
  %322 = vrot.lane.b32.xlu0 %v320, 32
  %v323 = vpop.permute.xlu0 %322
  %v325 = vadd.f32 %v315, %v323
  %v326 = vtanh.pop %v325
  %328 = vrot.lane.b32.xlu0 %v326, 64
  %v329 = vpop.permute.xlu0 %328
  %v331 = vmul.f32 %v313, %v329
  %s332 = scalar_lea.vmem %s0, 24
  %v333 = vld [vmem:[%s332] sm:$0xff]
  %335 = vrot.lane.b32.xlu0 %v331, 32
  %v336 = vpop.permute.xlu0 %335
  %v337 = vsel %vm25, %v336, 0
  %339 = vmatprep.subr.mxu0 0.0
  %340 = vmatpush1.msra.mxu0 %v18
  %341 = vmatprep.subr.mxu0 0.0
  %342 = vmatpush1.msra.mxu0 %v19
  %343 = vmatprep.subr.mxu0 0.0
  %344 = vmatpush1.msra.mxu0 %v20
  %345 = vmatprep.subr.mxu0 0.0
  %346 = vmatpush1.msra.mxu0 %v21
  %347 = vmatprep.subr.mxu0 0.0
  %348 = vmatpush1.msra.mxu0 0.0
  %349 = vmatprep.subr.mxu0 0.0
  %350 = vmatpush1.msra.mxu0 0.0
  %351 = vmatprep.subr.mxu0 0.0
  %352 = vmatpush1.msra.mxu0 0.0
  %353 = vmatprep.subr.mxu0 0.0
  %354 = vmatpush1.msra.mxu0 0.0
  %355 = vmatprep.subr.mxu0 0.0
  %356 = vmatpush1.msra.mxu0 0.0
  %357 = vmatprep.subr.mxu0 0.0
  %358 = vmatpush1.msra.mxu0 0.0
  %359 = vmatprep.subr.mxu0 0.0
  %360 = vmatpush1.msra.mxu0 0.0
  %361 = vmatprep.subr.mxu0 0.0
  %362 = vmatpush1.msra.mxu0 0.0
  %363 = vmatprep.subr.mxu0 0.0
  %364 = vmatpush1.msra.mxu0 0.0
  %365 = vmatprep.subr.mxu0 0.0
  %366 = vmatpush1.msra.mxu0 0.0
  %367 = vmatprep.subr.mxu0 0.0
  %368 = vmatpush1.msra.mxu0 0.0
  %369 = vmatprep.subr.mxu0 0.0
  %370 = vmatpush1.msra.mxu0 0.0
  %371 = vmatprep.subr.mxu0 0.0
  %372 = vmatpush1.msra.mxu0 0.0
  %373 = vmatprep.subr.mxu0 0.0
  %374 = vmatpush1.msra.mxu0 0.0
  %375 = vmatprep.subr.mxu0 0.0
  %376 = vmatpush1.msra.mxu0 0.0
  %377 = vmatprep.subr.mxu0 0.0
  %378 = vmatpush1.msra.mxu0 0.0
  %379 = vmatprep.subr.mxu0 0.0
  %380 = vmatpush1.msra.mxu0 0.0
  %381 = vmatprep.subr.mxu0 0.0
  %382 = vmatpush1.msra.mxu0 0.0
  %383 = vmatprep.subr.mxu0 0.0
  %384 = vmatpush1.msra.mxu0 0.0
  %385 = vmatprep.subr.mxu0 0.0
  %386 = vmatpush1.msra.mxu0 0.0
  %387 = vmatprep.subr.mxu0 0.0
  %388 = vmatpush1.msra.mxu0 0.0
  %389 = vmatprep.subr.mxu0 0.0
  %390 = vmatpush1.msra.mxu0 0.0
  %391 = vmatprep.subr.mxu0 0.0
  %392 = vmatpush1.msra.mxu0 0.0
  %393 = vmatprep.subr.mxu0 0.0
  %394 = vmatpush1.msra.mxu0 0.0
  %395 = vmatprep.subr.mxu0 0.0
  %396 = vmatpush1.msra.mxu0 0.0
  %397 = vmatprep.subr.mxu0 0.0
  %398 = vmatpush1.msra.mxu0 0.0
  %399 = vmatprep.subr.mxu0 0.0
  %400 = vmatpush1.msra.mxu0 0.0
  %401 = vmatprep.subr.mxu0 0.0
  %402 = vmatpush1.msra.mxu0 0.0
  %403 = vmatprep.mubr.f32.mxu0 0.0
  %404 = vmatmul.mubr.f32.gmra.mrb[0].mxu0 %v337
  %v405 = vpop.f32.mrb[0].mxu0
  %v406 = vadd.f32 0.0, %v405
  %v407 = vpop.f32.mrb[0].mxu0
  %408 = vdwg.mxu0
  %v409 = vadd.f32 %v333, %v406
  %v410 = vxor.u32 %v409, 2147483648
  %v411 = vmul.f32 %v410, 1.442695
  %v412 = vpow.pop %v411
  %v413 = vadd.f32 %v412, 1.0
  %v414 = vrcp.pop %v413
  %v415 = vmul.f32 1.0, %v414
  %v416 = vtanh.pop %v409
  %v417 = vmul.f32 %v415, %v325
  %419 = vrot.lane.b32.xlu0 %v416, 64
  %v420 = vpop.permute.xlu0 %419
  %v422 = vmul.f32 %v415, %v420
  %424 = vrot.lane.b32.xlu0 %v422, 32
  %v425 = vpop.permute.xlu0 %424
  %v427 = vadd.f32 %v417, %v425
  %v428 = vtanh.pop %v427
  %430 = vrot.lane.b32.xlu0 %v428, 64
  %v431 = vpop.permute.xlu0 %430
  %v433 = vmul.f32 %v415, %v431
  %s434 = scalar_lea.vmem %s0, 32
  %v435 = vld [vmem:[%s434] sm:$0xff]
  %437 = vrot.lane.b32.xlu0 %v433, 32
  %v438 = vpop.permute.xlu0 %437
  %v439 = vsel %vm25, %v438, 0
  %441 = vmatprep.subr.mxu0 0.0
  %442 = vmatpush1.msra.mxu0 %v18
  %443 = vmatprep.subr.mxu0 0.0
  %444 = vmatpush1.msra.mxu0 %v19
  %445 = vmatprep.subr.mxu0 0.0
  %446 = vmatpush1.msra.mxu0 %v20
  %447 = vmatprep.subr.mxu0 0.0
  %448 = vmatpush1.msra.mxu0 %v21
  %449 = vmatprep.subr.mxu0 0.0
  %450 = vmatpush1.msra.mxu0 0.0
  %451 = vmatprep.subr.mxu0 0.0
  %452 = vmatpush1.msra.mxu0 0.0
  %453 = vmatprep.subr.mxu0 0.0
  %454 = vmatpush1.msra.mxu0 0.0
  %455 = vmatprep.subr.mxu0 0.0
  %456 = vmatpush1.msra.mxu0 0.0
  %457 = vmatprep.subr.mxu0 0.0
  %458 = vmatpush1.msra.mxu0 0.0
  %459 = vmatprep.subr.mxu0 0.0
  %460 = vmatpush1.msra.mxu0 0.0
  %461 = vmatprep.subr.mxu0 0.0
  %462 = vmatpush1.msra.mxu0 0.0
  %463 = vmatprep.subr.mxu0 0.0
  %464 = vmatpush1.msra.mxu0 0.0
  %465 = vmatprep.subr.mxu0 0.0
  %466 = vmatpush1.msra.mxu0 0.0
  %467 = vmatprep.subr.mxu0 0.0
  %468 = vmatpush1.msra.mxu0 0.0
  %469 = vmatprep.subr.mxu0 0.0
  %470 = vmatpush1.msra.mxu0 0.0
  %471 = vmatprep.subr.mxu0 0.0
  %472 = vmatpush1.msra.mxu0 0.0
  %473 = vmatprep.subr.mxu0 0.0
  %474 = vmatpush1.msra.mxu0 0.0
  %475 = vmatprep.subr.mxu0 0.0
  %476 = vmatpush1.msra.mxu0 0.0
  %477 = vmatprep.subr.mxu0 0.0
  %478 = vmatpush1.msra.mxu0 0.0
  %479 = vmatprep.subr.mxu0 0.0
  %480 = vmatpush1.msra.mxu0 0.0
  %481 = vmatprep.subr.mxu0 0.0
  %482 = vmatpush1.msra.mxu0 0.0
  %483 = vmatprep.subr.mxu0 0.0
  %484 = vmatpush1.msra.mxu0 0.0
  %485 = vmatprep.subr.mxu0 0.0
  %486 = vmatpush1.msra.mxu0 0.0
  %487 = vmatprep.subr.mxu0 0.0
  %488 = vmatpush1.msra.mxu0 0.0
  %489 = vmatprep.subr.mxu0 0.0
  %490 = vmatpush1.msra.mxu0 0.0
  %491 = vmatprep.subr.mxu0 0.0
  %492 = vmatpush1.msra.mxu0 0.0
  %493 = vmatprep.subr.mxu0 0.0
  %494 = vmatpush1.msra.mxu0 0.0
  %495 = vmatprep.subr.mxu0 0.0
  %496 = vmatpush1.msra.mxu0 0.0
  %497 = vmatprep.subr.mxu0 0.0
  %498 = vmatpush1.msra.mxu0 0.0
  %499 = vmatprep.subr.mxu0 0.0
  %500 = vmatpush1.msra.mxu0 0.0
  %501 = vmatprep.subr.mxu0 0.0
  %502 = vmatpush1.msra.mxu0 0.0
  %503 = vmatprep.subr.mxu0 0.0
  %504 = vmatpush1.msra.mxu0 0.0
  %505 = vmatprep.mubr.f32.mxu0 0.0
  %506 = vmatmul.mubr.f32.gmra.mrb[0].mxu0 %v439
  %v507 = vpop.f32.mrb[0].mxu0
  %v508 = vadd.f32 0.0, %v507
  %v509 = vpop.f32.mrb[0].mxu0
  %510 = vdwg.mxu0
  %v511 = vadd.f32 %v435, %v508
  %v512 = vxor.u32 %v511, 2147483648
  %v513 = vmul.f32 %v512, 1.442695
  %v514 = vpow.pop %v513
  %v515 = vadd.f32 %v514, 1.0
  %v516 = vrcp.pop %v515
  %v517 = vmul.f32 1.0, %v516
  %v518 = vtanh.pop %v511
  %v519 = vmul.f32 %v517, %v427
  %521 = vrot.lane.b32.xlu0 %v518, 64
  %v522 = vpop.permute.xlu0 %521
  %v524 = vmul.f32 %v517, %v522
  %526 = vrot.lane.b32.xlu0 %v524, 32
  %v527 = vpop.permute.xlu0 %526
  %v529 = vadd.f32 %v519, %v527
  %v530 = vtanh.pop %v529
  %532 = vrot.lane.b32.xlu0 %v530, 64
  %v533 = vpop.permute.xlu0 %532
  %v535 = vmul.f32 %v517, %v533
  %s536 = scalar_lea.vmem %s0, 40
  %v537 = vld [vmem:[%s536] sm:$0xff]
  %539 = vrot.lane.b32.xlu0 %v535, 32
  %v540 = vpop.permute.xlu0 %539
  %v541 = vsel %vm25, %v540, 0
  %543 = vmatprep.subr.mxu0 0.0
  %544 = vmatpush1.msra.mxu0 %v18
  %545 = vmatprep.subr.mxu0 0.0
  %546 = vmatpush1.msra.mxu0 %v19
  %547 = vmatprep.subr.mxu0 0.0
  %548 = vmatpush1.msra.mxu0 %v20
  %549 = vmatprep.subr.mxu0 0.0
  %550 = vmatpush1.msra.mxu0 %v21
  %551 = vmatprep.subr.mxu0 0.0
  %552 = vmatpush1.msra.mxu0 0.0
  %553 = vmatprep.subr.mxu0 0.0
  %554 = vmatpush1.msra.mxu0 0.0
  %555 = vmatprep.subr.mxu0 0.0
  %556 = vmatpush1.msra.mxu0 0.0
  %557 = vmatprep.subr.mxu0 0.0
  %558 = vmatpush1.msra.mxu0 0.0
  %559 = vmatprep.subr.mxu0 0.0
  %560 = vmatpush1.msra.mxu0 0.0
  %561 = vmatprep.subr.mxu0 0.0
  %562 = vmatpush1.msra.mxu0 0.0
  %563 = vmatprep.subr.mxu0 0.0
  %564 = vmatpush1.msra.mxu0 0.0
  %565 = vmatprep.subr.mxu0 0.0
  %566 = vmatpush1.msra.mxu0 0.0
  %567 = vmatprep.subr.mxu0 0.0
  %568 = vmatpush1.msra.mxu0 0.0
  %569 = vmatprep.subr.mxu0 0.0
  %570 = vmatpush1.msra.mxu0 0.0
  %571 = vmatprep.subr.mxu0 0.0
  %572 = vmatpush1.msra.mxu0 0.0
  %573 = vmatprep.subr.mxu0 0.0
  %574 = vmatpush1.msra.mxu0 0.0
  %575 = vmatprep.subr.mxu0 0.0
  %576 = vmatpush1.msra.mxu0 0.0
  %577 = vmatprep.subr.mxu0 0.0
  %578 = vmatpush1.msra.mxu0 0.0
  %579 = vmatprep.subr.mxu0 0.0
  %580 = vmatpush1.msra.mxu0 0.0
  %581 = vmatprep.subr.mxu0 0.0
  %582 = vmatpush1.msra.mxu0 0.0
  %583 = vmatprep.subr.mxu0 0.0
  %584 = vmatpush1.msra.mxu0 0.0
  %585 = vmatprep.subr.mxu0 0.0
  %586 = vmatpush1.msra.mxu0 0.0
  %587 = vmatprep.subr.mxu0 0.0
  %588 = vmatpush1.msra.mxu0 0.0
  %589 = vmatprep.subr.mxu0 0.0
  %590 = vmatpush1.msra.mxu0 0.0
  %591 = vmatprep.subr.mxu0 0.0
  %592 = vmatpush1.msra.mxu0 0.0
  %593 = vmatprep.subr.mxu0 0.0
  %594 = vmatpush1.msra.mxu0 0.0
  %595 = vmatprep.subr.mxu0 0.0
  %596 = vmatpush1.msra.mxu0 0.0
  %597 = vmatprep.subr.mxu0 0.0
  %598 = vmatpush1.msra.mxu0 0.0
  %599 = vmatprep.subr.mxu0 0.0
  %600 = vmatpush1.msra.mxu0 0.0
  %601 = vmatprep.subr.mxu0 0.0
  %602 = vmatpush1.msra.mxu0 0.0
  %603 = vmatprep.subr.mxu0 0.0
  %604 = vmatpush1.msra.mxu0 0.0
  %605 = vmatprep.subr.mxu0 0.0
  %606 = vmatpush1.msra.mxu0 0.0
  %607 = vmatprep.mubr.f32.mxu0 0.0
  %608 = vmatmul.mubr.f32.gmra.mrb[0].mxu0 %v541
  %v609 = vpop.f32.mrb[0].mxu0
  %v610 = vadd.f32 0.0, %v609
  %v611 = vpop.f32.mrb[0].mxu0
  %612 = vdwg.mxu0
  %v613 = vadd.f32 %v537, %v610
  %v614 = vxor.u32 %v613, 2147483648
  %v615 = vmul.f32 %v614, 1.442695
  %v616 = vpow.pop %v615
  %v617 = vadd.f32 %v616, 1.0
  %v618 = vrcp.pop %v617
  %v619 = vmul.f32 1.0, %v618
  %v620 = vtanh.pop %v613
  %v621 = vmul.f32 %v619, %v529
  %623 = vrot.lane.b32.xlu0 %v620, 64
  %v624 = vpop.permute.xlu0 %623
  %v626 = vmul.f32 %v619, %v624
  %628 = vrot.lane.b32.xlu0 %v626, 32
  %v629 = vpop.permute.xlu0 %628
  %v631 = vadd.f32 %v621, %v629
  %v632 = vtanh.pop %v631
  %634 = vrot.lane.b32.xlu0 %v632, 64
  %v635 = vpop.permute.xlu0 %634
  %v637 = vmul.f32 %v619, %v635
  %s638 = scalar_lea.vmem %s0, 48
  %v639 = vld [vmem:[%s638] sm:$0xff]
  %641 = vrot.lane.b32.xlu0 %v637, 32
  %v642 = vpop.permute.xlu0 %641
  %v643 = vsel %vm25, %v642, 0
  %645 = vmatprep.subr.mxu0 0.0
  %646 = vmatpush1.msra.mxu0 %v18
  %647 = vmatprep.subr.mxu0 0.0
  %648 = vmatpush1.msra.mxu0 %v19
  %649 = vmatprep.subr.mxu0 0.0
  %650 = vmatpush1.msra.mxu0 %v20
  %651 = vmatprep.subr.mxu0 0.0
  %652 = vmatpush1.msra.mxu0 %v21
  %653 = vmatprep.subr.mxu0 0.0
  %654 = vmatpush1.msra.mxu0 0.0
  %655 = vmatprep.subr.mxu0 0.0
  %656 = vmatpush1.msra.mxu0 0.0
  %657 = vmatprep.subr.mxu0 0.0
  %658 = vmatpush1.msra.mxu0 0.0
  %659 = vmatprep.subr.mxu0 0.0
  %660 = vmatpush1.msra.mxu0 0.0
  %661 = vmatprep.subr.mxu0 0.0
  %662 = vmatpush1.msra.mxu0 0.0
  %663 = vmatprep.subr.mxu0 0.0
  %664 = vmatpush1.msra.mxu0 0.0
  %665 = vmatprep.subr.mxu0 0.0
  %666 = vmatpush1.msra.mxu0 0.0
  %667 = vmatprep.subr.mxu0 0.0
  %668 = vmatpush1.msra.mxu0 0.0
  %669 = vmatprep.subr.mxu0 0.0
  %670 = vmatpush1.msra.mxu0 0.0
  %671 = vmatprep.subr.mxu0 0.0
  %672 = vmatpush1.msra.mxu0 0.0
  %673 = vmatprep.subr.mxu0 0.0
  %674 = vmatpush1.msra.mxu0 0.0
  %675 = vmatprep.subr.mxu0 0.0
  %676 = vmatpush1.msra.mxu0 0.0
  %677 = vmatprep.subr.mxu0 0.0
  %678 = vmatpush1.msra.mxu0 0.0
  %679 = vmatprep.subr.mxu0 0.0
  %680 = vmatpush1.msra.mxu0 0.0
  %681 = vmatprep.subr.mxu0 0.0
  %682 = vmatpush1.msra.mxu0 0.0
  %683 = vmatprep.subr.mxu0 0.0
  %684 = vmatpush1.msra.mxu0 0.0
  %685 = vmatprep.subr.mxu0 0.0
  %686 = vmatpush1.msra.mxu0 0.0
  %687 = vmatprep.subr.mxu0 0.0
  %688 = vmatpush1.msra.mxu0 0.0
  %689 = vmatprep.subr.mxu0 0.0
  %690 = vmatpush1.msra.mxu0 0.0
  %691 = vmatprep.subr.mxu0 0.0
  %692 = vmatpush1.msra.mxu0 0.0
  %693 = vmatprep.subr.mxu0 0.0
  %694 = vmatpush1.msra.mxu0 0.0
  %695 = vmatprep.subr.mxu0 0.0
  %696 = vmatpush1.msra.mxu0 0.0
  %697 = vmatprep.subr.mxu0 0.0
  %698 = vmatpush1.msra.mxu0 0.0
  %699 = vmatprep.subr.mxu0 0.0
  %700 = vmatpush1.msra.mxu0 0.0
  %701 = vmatprep.subr.mxu0 0.0
  %702 = vmatpush1.msra.mxu0 0.0
  %703 = vmatprep.subr.mxu0 0.0
  %704 = vmatpush1.msra.mxu0 0.0
  %705 = vmatprep.subr.mxu0 0.0
  %706 = vmatpush1.msra.mxu0 0.0
  %707 = vmatprep.subr.mxu0 0.0
  %708 = vmatpush1.msra.mxu0 0.0
  %709 = vmatprep.mubr.f32.mxu0 0.0
  %710 = vmatmul.mubr.f32.gmra.mrb[0].mxu0 %v643
  %v711 = vpop.f32.mrb[0].mxu0
  %v712 = vadd.f32 0.0, %v711
  %v713 = vpop.f32.mrb[0].mxu0
  %714 = vdwg.mxu0
  %v715 = vadd.f32 %v639, %v712
  %v716 = vxor.u32 %v715, 2147483648
  %v717 = vmul.f32 %v716, 1.442695
  %v718 = vpow.pop %v717
  %v719 = vadd.f32 %v718, 1.0
  %v720 = vrcp.pop %v719
  %v721 = vmul.f32 1.0, %v720
  %v722 = vtanh.pop %v715
  %v723 = vmul.f32 %v721, %v631
  %725 = vrot.lane.b32.xlu0 %v722, 64
  %v726 = vpop.permute.xlu0 %725
  %v728 = vmul.f32 %v721, %v726
  %730 = vrot.lane.b32.xlu0 %v728, 32
  %v731 = vpop.permute.xlu0 %730
  %v733 = vadd.f32 %v723, %v731
  %v734 = vtanh.pop %v733
  %736 = vrot.lane.b32.xlu0 %v734, 64
  %v737 = vpop.permute.xlu0 %736
  %v739 = vmul.f32 %v721, %v737
  %s740 = scalar_lea.vmem %s0, 56
  %v741 = vld [vmem:[%s740] sm:$0xff]
  %743 = vrot.lane.b32.xlu0 %v739, 32
  %v744 = vpop.permute.xlu0 %743
  %v745 = vsel %vm25, %v744, 0
  %747 = vmatprep.subr.mxu0 0.0
  %748 = vmatpush1.msra.mxu0 %v18
  %749 = vmatprep.subr.mxu0 0.0
  %750 = vmatpush1.msra.mxu0 %v19
  %751 = vmatprep.subr.mxu0 0.0
  %752 = vmatpush1.msra.mxu0 %v20
  %753 = vmatprep.subr.mxu0 0.0
  %754 = vmatpush1.msra.mxu0 %v21
  %755 = vmatprep.subr.mxu0 0.0
  %756 = vmatpush1.msra.mxu0 0.0
  %757 = vmatprep.subr.mxu0 0.0
  %758 = vmatpush1.msra.mxu0 0.0
  %759 = vmatprep.subr.mxu0 0.0
  %760 = vmatpush1.msra.mxu0 0.0
  %761 = vmatprep.subr.mxu0 0.0
  %762 = vmatpush1.msra.mxu0 0.0
  %763 = vmatprep.subr.mxu0 0.0
  %764 = vmatpush1.msra.mxu0 0.0
  %765 = vmatprep.subr.mxu0 0.0
  %766 = vmatpush1.msra.mxu0 0.0
  %767 = vmatprep.subr.mxu0 0.0
  %768 = vmatpush1.msra.mxu0 0.0
  %769 = vmatprep.subr.mxu0 0.0
  %770 = vmatpush1.msra.mxu0 0.0
  %771 = vmatprep.subr.mxu0 0.0
  %772 = vmatpush1.msra.mxu0 0.0
  %773 = vmatprep.subr.mxu0 0.0
  %774 = vmatpush1.msra.mxu0 0.0
  %775 = vmatprep.subr.mxu0 0.0
  %776 = vmatpush1.msra.mxu0 0.0
  %777 = vmatprep.subr.mxu0 0.0
  %778 = vmatpush1.msra.mxu0 0.0
  %779 = vmatprep.subr.mxu0 0.0
  %780 = vmatpush1.msra.mxu0 0.0
  %781 = vmatprep.subr.mxu0 0.0
  %782 = vmatpush1.msra.mxu0 0.0
  %783 = vmatprep.subr.mxu0 0.0
  %784 = vmatpush1.msra.mxu0 0.0
  %785 = vmatprep.subr.mxu0 0.0
  %786 = vmatpush1.msra.mxu0 0.0
  %787 = vmatprep.subr.mxu0 0.0
  %788 = vmatpush1.msra.mxu0 0.0
  %789 = vmatprep.subr.mxu0 0.0
  %790 = vmatpush1.msra.mxu0 0.0
  %791 = vmatprep.subr.mxu0 0.0
  %792 = vmatpush1.msra.mxu0 0.0
  %793 = vmatprep.subr.mxu0 0.0
  %794 = vmatpush1.msra.mxu0 0.0
  %795 = vmatprep.subr.mxu0 0.0
  %796 = vmatpush1.msra.mxu0 0.0
  %797 = vmatprep.subr.mxu0 0.0
  %798 = vmatpush1.msra.mxu0 0.0
  %799 = vmatprep.subr.mxu0 0.0
  %800 = vmatpush1.msra.mxu0 0.0
  %801 = vmatprep.subr.mxu0 0.0
  %802 = vmatpush1.msra.mxu0 0.0
  %803 = vmatprep.subr.mxu0 0.0
  %804 = vmatpush1.msra.mxu0 0.0
  %805 = vmatprep.subr.mxu0 0.0
  %806 = vmatpush1.msra.mxu0 0.0
  %807 = vmatprep.subr.mxu0 0.0
  %808 = vmatpush1.msra.mxu0 0.0
  %809 = vmatprep.subr.mxu0 0.0
  %810 = vmatpush1.msra.mxu0 0.0
  %811 = vmatprep.mubr.f32.mxu0 0.0
  %812 = vmatmul.mubr.f32.gmra.mrb[0].mxu0 %v745
  %v813 = vpop.f32.mrb[0].mxu0
  %v814 = vadd.f32 0.0, %v813
  %v815 = vpop.f32.mrb[0].mxu0
  %816 = vdwg.mxu0
  %v817 = vadd.f32 %v741, %v814
  %v818 = vxor.u32 %v817, 2147483648
  %v819 = vmul.f32 %v818, 1.442695
  %v820 = vpow.pop %v819
  %v821 = vadd.f32 %v820, 1.0
  %v822 = vrcp.pop %v821
  %v823 = vmul.f32 1.0, %v822
  %v824 = vtanh.pop %v817
  %v825 = vmul.f32 %v823, %v733
  %827 = vrot.lane.b32.xlu0 %v824, 64
  %v828 = vpop.permute.xlu0 %827
  %v830 = vmul.f32 %v823, %v828
  %832 = vrot.lane.b32.xlu0 %v830, 32
  %v833 = vpop.permute.xlu0 %832
  %v835 = vadd.f32 %v825, %v833
  %v836 = vtanh.pop %v835
  %838 = vrot.lane.b32.xlu0 %v836, 64
  %v839 = vpop.permute.xlu0 %838
  %v841 = vmul.f32 %v823, %v839
  %843 = vrot.lane.b32.xlu0 %v841, 32
  %v844 = vpop.permute.xlu0 %843
  %846 = vst.msk [vmem:[#allocation2] sm:$0xff] %vm25, %v844
  %848 = vrot.lane.b32.xlu0 %v835, 96
  %v849 = vpop.permute.xlu0 %848
  %851 = vst.msk [vmem:[#allocation3] sm:$0xff] %vm25, %v849
  // Predicated region
  $region14: #{lstm_forward.1} parent=0 // pred_check
    %p852 = pneg %p11
  $region15: #{lstm_forward.1} parent=0 // pred_check_branch
    %854 = sbr.rel (%p852) target = $region17
  $region16: #{lstm_forward.1} parent=0 // pred_region
    %855 = vst.msk [vmem:[%s2] sm:$0xff] %vm25, %v844
  $region17: #{lstm_forward.1} parent=0 // pred_fallthru
    _
  // Predicated region
  $region18: #{lstm_forward.1} parent=0 // pred_check
    _
  $region19: #{lstm_forward.1} parent=0 // pred_check_branch
    %857 = sbr.rel (0) target = $region21
  $region20: #{lstm_forward.1} parent=0 // pred_region
    _
  $region21: #{lstm_forward.1} parent=0 // pred_fallthru
    _
  // Predicated region
  $region22: #{lstm_forward.1} parent=0 // pred_check
    _
  $region23: #{lstm_forward.1} parent=0 // pred_check_branch
    %859 = sbr.rel (0) target = $region25
  $region24: #{lstm_forward.1} parent=0 // pred_region
    _
  $region25: #{lstm_forward.1} parent=0 // pred_fallthru
    _

</llo_original>
